<compile_context>
chip_gen: v5e
topology: v5e:2x2
jax: 0.10.0
libtpu: 0.0.40
codegen_flags: <defaults>
</compile_context>

<pallas_src>
import math

import jax
import jax.numpy as jnp
from jax import lax
from jax.experimental import pallas as pl
from jax.experimental.pallas import tpu as pltpu

_LANE = 128


def _round_down(x, m):
    return (x // m) * m


def _round_up(x, m):
    return ((x + m - 1) // m) * m


def make_dct_1d_weight(channel: int) -> jnp.ndarray:
    """Per-channel DCT pooling coefficients cos(pi*(c+0.5)/C)/sqrt(C), shape (C,)."""
    freqs = jnp.arange(channel, dtype=jnp.float32)
    return jnp.cos(jnp.pi * (freqs + 0.5) / channel) / math.sqrt(channel)


def _tpu_generation_params():
    kind = ""
    try:
        kind = jax.devices()[0].device_kind.lower()
    except Exception:
        pass
    if "v7" in kind:
        # ~3.2 TB/s HBM: big blocks amortize the ~0.35us/step overhead; 2 TCs/chip.
        return dict(target_block_bytes=7 << 20, want_two_steps=True, bf16_vpu=True)
    if "v6" in kind:
        return dict(target_block_bytes=5 << 20, want_two_steps=False, bf16_vpu=True)
    # v5e / older / unknown: conservative (16 MiB scoped-VMEM default, no bf16 VALU).
    return dict(target_block_bytes=3 << 20, want_two_steps=False, bf16_vpu=False)


def _choose_tiles(B, C, HW, elem_bytes, sub, target_bytes):
    """Pick x-block shape (tb, tc, thw) of roughly `target_bytes`.

    Invariants kept:
      * thw is a multiple of 128 or equals HW (lane axis stays dense).
      * tc equals C or is a multiple of the sublane count `sub`.
      * tb equals B or is a multiple of `sub` (so the (tb, thw) output block is aligned).
    """
    min_tb = B if B < sub else sub

    # 1) Full channel + full spatial extent per block; grow the batch tile.
    full_row = C * HW * elem_bytes
    if min_tb * full_row <= target_bytes:
        tb_fit = target_bytes // full_row
        if tb_fit >= B:
            tb = B
        else:
            tb = max(sub, _round_down(tb_fit, sub))
        return tb, C, HW

    tb = min_tb

    # 2) Large C: split the channel (reduction) grid axis instead of shrinking the
    #    batch/spatial tiles; keeps DMAs long and output tiles lane/sublane dense.
    if C > sub:
        tc_fit = target_bytes // max(1, tb * HW * elem_bytes)
        if tc_fit >= sub:
            return tb, min(C, _round_down(tc_fit, sub)), HW
        tc = sub
    else:
        tc = C

    # 3) Still too big: shrink the spatial (lane) axis in multiples of 128.
    thw_fit = target_bytes // max(1, tb * tc * elem_bytes)
    thw = max(_LANE, _round_down(thw_fit, _LANE))
    if thw >= HW:
        thw = HW
    return tb, tc, thw


def _make_kernel(c_total, tc, compute_dtype):
    needs_mask = (c_total % tc) != 0  # only when the C grid axis has a ragged tail

    def kernel(x_ref, w_ref, o_ref, acc_ref):
        # x_ref: (TB, TC, THW), w_ref: (TC, 1), o_ref: (TB, THW), acc_ref: f32 (TB, THW)
        k = pl.program_id(2)

        @pl.when(k == 0)
        def _init():
            acc_ref[...] = jnp.zeros_like(acc_ref)

        x = x_ref[...].astype(compute_dtype)
        w = w_ref[...].astype(compute_dtype)      # (TC, 1) per-channel scalar
        prod = x * w[None, :, :]                  # VPU multiply; C on sublanes, HW on lanes
        if needs_mask:
            # Tail C block: padded channels hold unspecified data -> mask them out.
            c_idx = k * tc + lax.broadcasted_iota(jnp.int32, prod.shape, 1)
            prod = jnp.where(c_idx < c_total, prod, jnp.array(0, prod.dtype))
        # Cross-sublane (XLU) reduce over C; accumulate in f32.
        acc_ref[...] += jnp.sum(prod, axis=1, dtype=jnp.float32)

        @pl.when(k == pl.num_programs(2) - 1)
        def _finish():
            o_ref[...] = acc_ref[...].astype(o_ref.dtype)

    return kernel


def dct_1d_pooling(x: jnp.ndarray, weight_c: jnp.ndarray) -> jnp.ndarray:
    """x: (B, C, H, W); weight_c: (C,) per-channel weights. Returns (B, 1, H, W)."""
    B, C, H, W = x.shape
    assert weight_c.shape == (C,)
    HW = H * W
    elem = x.dtype.itemsize
    sub = max(8, 32 // elem)  # sublane multiple: 8 f32, 16 bf16/f16, 32 int8/fp8

    params = _tpu_generation_params()

    x2 = x.reshape(B, C, HW)                          # lane-dense spatial axis
    w2 = weight_c.reshape(C, 1).astype(jnp.float32)   # C on the sublane axis

    tb, tc, thw = _choose_tiles(B, C, HW, elem, sub, params["target_block_bytes"])

    # v7x: keep both TensorCores busy when the whole tensor would fit in one block.
    if params["want_two_steps"] and pl.cdiv(B, tb) * pl.cdiv(HW, thw) == 1:
        if HW >= 2 * _LANE and thw == HW:
            thw = _round_up(pl.cdiv(HW, 2), _LANE)
        elif B >= 2 * sub and tb == B:
            tb = _round_up(pl.cdiv(B, 2), sub)

    grid = (pl.cdiv(B, tb), pl.cdiv(HW, thw), pl.cdiv(C, tc))  # reduction (C) axis last

    # bf16 inputs: multiply in bf16 on v6e/v7x (bf16 VPU), accumulate in f32;
    # upcast to f32 on v5e (no bf16 VALU). f32 inputs stay f32.
    if x.dtype == jnp.bfloat16 and params["bf16_vpu"]:
        compute_dtype = jnp.bfloat16
    else:
        compute_dtype = jnp.float32

    # Explicit VMEM budget: double-buffered x/w/out blocks + f32 accumulator + slack.
    x_blk = tb * tc * thw * elem
    o_blk = tb * thw * elem
    w_blk = _round_up(tc, sub) * _LANE * 4            # (tc,1) pads to (sub-mult, 128)
    acc_blk = tb * thw * 4
    vmem_limit = 2 * (x_blk + o_blk + w_blk) + acc_blk + (2 << 20)
    vmem_limit = int(min(max(vmem_limit, 8 << 20), 32 << 20))

    kernel = _make_kernel(C, tc, compute_dtype)

    out2 = pl.pallas_call(
        kernel,
        out_shape=jax.ShapeDtypeStruct((B, HW), x.dtype),
        grid_spec=pltpu.PrefetchScalarGridSpec(
            num_scalar_prefetch=0,
            grid=grid,
            in_specs=[
                pl.BlockSpec((tb, tc, thw), lambda b, s, k: (b, k, s)),
                pl.BlockSpec((tc, 1), lambda b, s, k: (k, 0)),
            ],
            out_specs=pl.BlockSpec((tb, thw), lambda b, s, k: (b, s)),
            scratch_shapes=[pltpu.VMEM((tb, thw), jnp.float32)],
        ),
        compiler_params=pltpu.CompilerParams(
            dimension_semantics=("parallel", "parallel", "arbitrary"),
            vmem_limit_bytes=vmem_limit,
        ),
    )(x2, w2)

    return out2.reshape(B, 1, H, W)


if __name__ == "__main__":
    B, C, H, W = 2, 4, 16, 16

    key = jax.random.PRNGKey(0)
    x = jax.random.normal(key, (B, C, H, W), dtype=jnp.float32)

    weight = make_dct_1d_weight(C)          # (C,) per-channel coefficients

    out = jax.block_until_ready(dct_1d_pooling(x, weight))

    # Pure-JAX reference (same math as the PyTorch forward).
    ref = jnp.sum(x * weight[None, :, None, None], axis=1, keepdims=True)
    assert out.shape == (B, 1, H, W)
    assert jnp.allclose(out, ref, atol=1e-5, rtol=1e-5)

    print("KERNEL_OK")
</pallas_src>

<mosaic_0001>
module attributes {stable_mosaic.version = 11 : i64} {
  func.func @kernel(%arg0: i32, %arg1: i32, %arg2: i32, %arg3: memref<2x4x256xf32, #tpu.memory_space<vmem>>, %arg4: memref<4x1xf32, #tpu.memory_space<vmem>>, %arg5: memref<2x256xf32, #tpu.memory_space<vmem>>, %arg6: memref<2x256xf32, #tpu.memory_space<vmem>>) attributes {dimension_semantics = [#tpu.dimension_semantics<parallel>, #tpu.dimension_semantics<parallel>, #tpu.dimension_semantics<arbitrary>], iteration_bounds = array<i64: 1, 1, 1>, scalar_prefetch = 0 : i64, scratch_operands = 1 : i64, tpu.core_type = #tpu.core_type<tc>, window_params = [{transform_indices = @transform_0, window_bounds = array<i64: 2, 4, 256>}, {transform_indices = @transform_1, window_bounds = array<i64: 4, 1>}, {transform_indices = @transform_2, window_bounds = array<i64: 2, 256>}]} {
    %c0_i32 = arith.constant 0 : i32
    %0 = arith.cmpi eq, %arg2, %c0_i32 : i32
    %1 = arith.extui %0 : i1 to i32
    %c0_i32_0 = arith.constant 0 : i32
    %2 = arith.cmpi ne, %1, %c0_i32_0 : i32
    scf.if %2 {
      %cst_11 = arith.constant 0.000000e+00 : f32
      %15 = vector.broadcast %cst_11 : f32 to vector<2x256xf32>
      %c0_12 = arith.constant 0 : index
      %c0_13 = arith.constant 0 : index
      %16 = vector.load %arg6[%c0_12, %c0_13] : memref<2x256xf32, #tpu.memory_space<vmem>>, vector<2x256xf32>
      tpu.vector_store %arg6[%c0_12, %c0_13], %15 {strides = array<i32>} : memref<2x256xf32, #tpu.memory_space<vmem>>, vector<2x256xf32>,
    } else {
    }
    %c0 = arith.constant 0 : index
    %c0_1 = arith.constant 0 : index
    %c0_2 = arith.constant 0 : index
    %3 = vector.load %arg3[%c0, %c0_1, %c0_2] : memref<2x4x256xf32, #tpu.memory_space<vmem>>, vector<2x4x256xf32>
    %c0_3 = arith.constant 0 : index
    %c0_4 = arith.constant 0 : index
    %4 = vector.load %arg4[%c0_3, %c0_4] : memref<4x1xf32, #tpu.memory_space<vmem>>, vector<4x1xf32>
    %5 = vector.shape_cast %4 : vector<4x1xf32> to vector<1x4x1xf32>
    %6 = vector.broadcast %5 : vector<1x4x1xf32> to vector<2x4x256xf32>
    %7 = arith.mulf %3, %6 : vector<2x4x256xf32>
    %c0_5 = arith.constant 0 : index
    %c0_6 = arith.constant 0 : index
    %8 = vector.load %arg6[%c0_5, %c0_6] : memref<2x256xf32, #tpu.memory_space<vmem>>, vector<2x256xf32>
    %cst = arith.constant dense<0.000000e+00> : vector<2x256xf32>
    %9 = vector.multi_reduction <add>, %7, %cst [1] : vector<2x4x256xf32> to vector<2x256xf32>
    %10 = arith.addf %8, %9 : vector<2x256xf32>
    %c0_7 = arith.constant 0 : index
    %c0_8 = arith.constant 0 : index
    %11 = vector.load %arg6[%c0_7, %c0_8] : memref<2x256xf32, #tpu.memory_space<vmem>>, vector<2x256xf32>
    tpu.vector_store %arg6[%c0_7, %c0_8], %10 {strides = array<i32>} : memref<2x256xf32, #tpu.memory_space<vmem>>, vector<2x256xf32>,
    %c0_i32_9 = arith.constant 0 : i32
    %12 = arith.cmpi eq, %arg2, %c0_i32_9 : i32
    %13 = arith.extui %12 : i1 to i32
    %c0_i32_10 = arith.constant 0 : i32
    %14 = arith.cmpi ne, %13, %c0_i32_10 : i32
    scf.if %14 {
      %c0_11 = arith.constant 0 : index
      %c0_12 = arith.constant 0 : index
      %15 = vector.load %arg6[%c0_11, %c0_12] : memref<2x256xf32, #tpu.memory_space<vmem>>, vector<2x256xf32>
      %c0_13 = arith.constant 0 : index
      %c0_14 = arith.constant 0 : index
      %16 = vector.load %arg5[%c0_13, %c0_14] : memref<2x256xf32, #tpu.memory_space<vmem>>, vector<2x256xf32>
      tpu.vector_store %arg5[%c0_13, %c0_14], %15 {strides = array<i32>} : memref<2x256xf32, #tpu.memory_space<vmem>>, vector<2x256xf32>,
    } else {
    }
    return
  }
  func.func @transform_0(%arg0: i32, %arg1: i32, %arg2: i32) -> (i32, i32, i32) {
    %c0_i32 = arith.constant 0 : i32
    return %arg0, %arg2, %arg1 : i32, i32, i32
  }
  func.func @transform_1(%arg0: i32, %arg1: i32, %arg2: i32) -> (i32, i32) {
    %c0_i32 = arith.constant 0 : i32
    %c0_i32_0 = arith.constant 0 : i32
    return %arg2, %c0_i32 : i32, i32
  }
  func.func @transform_2(%arg0: i32, %arg1: i32, %arg2: i32) -> (i32, i32) {
    %c0_i32 = arith.constant 0 : i32
    return %arg0, %arg1 : i32, i32
  }
}

</mosaic_0001>

<llo_original>
// kernel: tpu_custom_call.1
$region0: #{tpu_custom_call.1}
  #allocation0 [shape = 'u32[]', space=smem, size = 0x4, offset = 0x4, fixed_abs, tag = 'smem constant byte address 0x4 - core index']
  #allocation1 [shape = 'u32[72,128]{1,0:T(1,128)}', space=vmem, size = 0x9000, scoped, tag = 'internal scratch']
  #allocation2 [shape = 'f32[2,256]{1,0:T(2,128)}', space=vmem, size = 0x800, scoped, tag = 'scratch operand']
  %s0 = inlined_call_operand.hbm [shape: f32[2,4,256], index: 0, kind: input, shape index: {}]
  %s1 = inlined_call_operand.vmem [shape: f32[4,1], index: 1, kind: input, shape index: {}]
  %s2 = inlined_call_operand.hbm [shape: f32[2,256], index: 2, kind: output, shape index: {}]
  %s3 = sld [smem:[#allocation0]]
  $region30: #{tpu_custom_call.1} parent=0
    _
  %s5 = ssub.s32 1, %s3
  %s6 = scalar_select 0, %s5, %s3
  $region1: #{tpu_custom_call.1} parent=0
    #allocation3 [shape = 'u8[8192]{0}', space=vmem, size = 0x2000, scoped, tag = 'input window, operand 0, single buffered']
    #allocation4 [shape = 's32[1]{0}', space=sflag, size = 0x4, scoped, tag = 'scoped memory for tpu_custom_call.1']
    #allocation5 [shape = 's32[1]{0}', space=sflag, size = 0x4, scoped, tag = 'scoped memory for tpu_custom_call.1']
    #allocation6 [shape = 'u8[2048]{0}', space=vmem, size = 0x800, scoped, tag = 'output window, operand 0, single buffered']
    %7 = vsyncpa [#allocation4], 0
    %8 = vsyncpa [#allocation5], 0
    // Predicated region
    $region2: #{tpu_custom_call.1} parent=1 // pred_check
      _
    $region3: #{tpu_custom_call.1} parent=1 // pred_check_branch
      %10 = sbr.rel (0) target = $region5
    $region4: #{tpu_custom_call.1} parent=1 // pred_region
      %12 = vsyncadd [#allocation4], 0
      %s13 = sshll.u32 %s0, 4
      %s14 = int_to_ptr.hbm [resolvable:$true] %s13
      %s15 = sshll.u32 [#allocation3], 4
      %s16 = int_to_ptr.vmem [resolvable:$true] %s15
      %21 = dma.hbm_to_vmem [thread:$0]  %s14, 256, %s16, [#allocation4], 128, 128, 8
    $region5: #{tpu_custom_call.1} parent=1 // pred_fallthru
      _
    // Predicated region
    $region6: #{tpu_custom_call.1} parent=1 // pred_check
      _
    $region7: #{tpu_custom_call.1} parent=1 // pred_check_branch
      %23 = sbr.rel (0) target = $region9
    $region8: #{tpu_custom_call.1} parent=1 // pred_region
      _
    $region9: #{tpu_custom_call.1} parent=1 // pred_fallthru
      _
    // Predicated region
    $region10: #{tpu_custom_call.1} parent=1 // pred_check
      _
    $region11: #{tpu_custom_call.1} parent=1 // pred_check_branch
      %25 = sbr.rel (0) target = $region13
    $region12: #{tpu_custom_call.1} parent=1 // pred_region
      %27 = dma.done [#allocation4], 256
    $region13: #{tpu_custom_call.1} parent=1 // pred_fallthru
      _
    %p28 = scmp.eq.s32.totalorder 0, 0
    // Predicated region
    $region14: #{tpu_custom_call.1} parent=1 // pred_check
      %p29 = pneg %p28
    $region15: #{tpu_custom_call.1} parent=1 // pred_check_branch
      %31 = sbr.rel (%p29) target = $region17
    $region16: #{tpu_custom_call.1} parent=1 // pred_region
      %32 = vst [vmem:[#allocation2] sm:$0xf] 0.0
    $region17: #{tpu_custom_call.1} parent=1 // pred_fallthru
      _
    %v33 = vld [vmem:[#allocation3] sm:$0xff]
    %v34 = vld [vmem:[#allocation3 + $0x8] sm:$0xff]
    %v35 = vld [vmem:[%s1] sm:$0xf]
    %37 = vset.pattern.permute.xlu0 0
    %38 = vperm.xlu0 %37, %v35
    %v39 = vpop.permute.xlu0 %38
    %v41 = vunpack.c.l.s4 839922192
    %v42 = vunpack.c.0.s8 %v41
    %v43 = vperm.slane %v39, %v42
    %v45 = vmul.f32 %v33, %v43
    %v46 = vmul.f32 %v34, %v43
    %v47 = vld [vmem:[#allocation2] sm:$0xf]
    %50 = vst [vmem:[#allocation1] ss:$2 sm:$0xff] %v45
    %v51 = vld.sshfl [vmem:[#allocation1] sm:$0xff pattern:$0x75316420]
    %v52 = vld.sshfl [vmem:[#allocation1 + $0x8] sm:$0xff pattern:$0x75316420]
    %s53 = scalar_lea.vmem [#allocation1], 16
    %54 = vst [vmem:[%s53] ss:$2 sm:$0xff] %v46
    %v55 = vld.sshfl [vmem:[#allocation1 + $0x10] sm:$0xff pattern:$0x75316420]
    %v56 = vld.sshfl [vmem:[#allocation1 + $0x18] sm:$0xff pattern:$0x75316420]
    %vm61 = vcmask 1043456
    %v62 = vsel %vm61, %v51, 0.0
    %v63 = vrot.slane %v62, 4
    %v64 = vadd.f32 %v62, %v63
    %v65 = vrot.slane %v64, 2
    %v66 = vadd.f32 %v64, %v65
    %v67 = vrot.slane %v66, 1
    %v68 = vadd.f32 %v66, %v67
    %v69 = vsel %vm61, %v52, 0.0
    %v70 = vrot.slane %v69, 4
    %v71 = vadd.f32 %v69, %v70
    %v72 = vrot.slane %v71, 2
    %v73 = vadd.f32 %v71, %v72
    %v74 = vrot.slane %v73, 1
    %v75 = vadd.f32 %v73, %v74
    %v76 = vsel %vm61, %v55, 0.0
    %v77 = vrot.slane %v76, 4
    %v78 = vadd.f32 %v76, %v77
    %v79 = vrot.slane %v78, 2
    %v80 = vadd.f32 %v78, %v79
    %v81 = vrot.slane %v80, 1
    %v82 = vadd.f32 %v80, %v81
    %v83 = vsel %vm61, %v56, 0.0
    %v84 = vrot.slane %v83, 4
    %v85 = vadd.f32 %v83, %v84
    %v86 = vrot.slane %v85, 2
    %v87 = vadd.f32 %v85, %v86
    %v88 = vrot.slane %v87, 1
    %v89 = vadd.f32 %v87, %v88
    %v94 = vrot.slane %v75, 6
    %v95 = vrot.slane %v89, 6
    %vm96 = vcmask 1041408
    %v97 = vsel %vm96, %v68, %v94
    %v98 = vsel %vm96, %v82, %v95
    %vm99 = vcmask 1044484
    %v100 = vsel %vm99, %v97, %v97
    %vm101 = vcmask 1046534
    %v102 = vsel %vm101, %v97, %v100
    %v103 = vrot.slane %v98, 7
    %vm104 = vcmask 1041409
    %v105 = vsel %vm104, %v103, %v102
    %vm106 = vcmask 1043459
    %v107 = vsel %vm106, %v103, %v105
    %vm108 = vcmask 1045509
    %v109 = vsel %vm108, %v103, %v107
    %vm110 = vcmask 1047559
    %v111 = vsel %vm110, %v103, %v109
    %v113 = vadd.f32 %v47, %v111
    %114 = vst [vmem:[#allocation2] sm:$0xf] %v113
    // Predicated region
    $region18: #{tpu_custom_call.1} parent=1 // pred_check
      %p115 = pneg %p28
    $region19: #{tpu_custom_call.1} parent=1 // pred_check_branch
      %117 = sbr.rel (%p115) target = $region21
    $region20: #{tpu_custom_call.1} parent=1 // pred_region
      %v118 = vld [vmem:[#allocation2] sm:$0xf]
      %119 = vst [vmem:[#allocation6] sm:$0xf] %v118
    $region21: #{tpu_custom_call.1} parent=1 // pred_fallthru
      _
    // Predicated region
    $region22: #{tpu_custom_call.1} parent=1 // pred_check
      _
    $region23: #{tpu_custom_call.1} parent=1 // pred_check_branch
      %121 = sbr.rel (0) target = $region25
    $region24: #{tpu_custom_call.1} parent=1 // pred_region
      %123 = vsyncadd [#allocation5], 0
      %s125 = sshll.u32 [#allocation6], 4
      %s126 = int_to_ptr.vmem [resolvable:$true] %s125
      %s127 = sshll.u32 %s2, 4
      %s128 = int_to_ptr.hbm [resolvable:$true] %s127
      %130 = dma.vmem_to_hbm [thread:$0]  %s126, 64, %s128, [#allocation5]
    $region25: #{tpu_custom_call.1} parent=1 // pred_fallthru
      _
    // Predicated region
    $region26: #{tpu_custom_call.1} parent=1 // pred_check
      _
    $region27: #{tpu_custom_call.1} parent=1 // pred_check_branch
      %132 = sbr.rel (0) target = $region29
    $region28: #{tpu_custom_call.1} parent=1 // pred_region
      %134 = dma.done [#allocation5], 64
    $region29: #{tpu_custom_call.1} parent=1 // pred_fallthru
      _
    %135 = vsyncpa [#allocation4], 1
    %136 = vsyncpa [#allocation5], 1

</llo_original>
